<compile_context>
chip_gen: v7x
topology: tpu7x:2x2x1
jax: 0.10.0
libtpu: 0.0.40
codegen_flags: <defaults>
</compile_context>

<pallas_src>
import functools

import jax
import jax.numpy as jnp
from jax.experimental import pallas as pl
from jax.experimental.pallas import tpu as pltpu

LANE = 128


def _round_up(n: int, m: int) -> int:
    return (n + m - 1) // m * m


# ----------------------------------------------------------------------------
# Fused kernel: all layers of the MLP in one pallas_call.
#   refs = (x, [w_0, b_0, (bits_0)], [w_1, b_1, (bits_1)], ..., out)
# ----------------------------------------------------------------------------
def _mlp_fused_kernel(*refs, num_layers: int, dropout_p: float,
                      negative_slope: float, use_dropout: bool):
    x_ref = refs[0]
    out_ref = refs[-1]
    per_layer = 3 if use_dropout else 2

    h = x_ref[...].astype(jnp.float32)
    if use_dropout:
        # P(drop) = P(bits < thresh) = thresh / 2^32 ~= dropout_p
        thresh = jnp.uint32(min(int(round(dropout_p * (1 << 32))), (1 << 32) - 1))

    for i in range(num_layers):
        base = 1 + i * per_layer
        w_ref = refs[base]
        b_ref = refs[base + 1]

        # Linear (MXU, f32 accumulation). 1/(1-p) scale is pre-folded into w/b.
        y = jnp.dot(h, w_ref[...], preferred_element_type=jnp.float32)
        y = y + b_ref[...]                       # (1, Dpad) broadcasts over batch

        if use_dropout:
            bits_ref = refs[base + 2]
            keep = bits_ref[...] >= thresh       # pure uint32 compare
            y = jnp.where(keep, y, 0.0)          # survivors already scaled

        # LeakyReLU (torch default negative_slope = 0.01)
        y = jnp.where(y >= 0.0, y, jnp.float32(negative_slope) * y)
        h = y

    out_ref[...] = h.astype(out_ref.dtype)


# ----------------------------------------------------------------------------
# Wrapper: pad to lane-dense shapes, fold dropout scale, single pallas_call.
# ----------------------------------------------------------------------------
def mlp_forward(params, x, *, dropout_p=0.3, negative_slope=0.01,
                training=True, rng_key=None):
    """params: list of (w, b) with w of shape (d_in, d_out), b of shape (1, d_out)."""
    batch, d_in = x.shape
    num_layers = len(params)
    use_dropout = bool(training) and float(dropout_p) > 0.0
    keep_scale = 1.0 / (1.0 - float(dropout_p)) if use_dropout else 1.0

    if use_dropout:
        if rng_key is None:
            rng_key = jax.random.PRNGKey(0)
        layer_keys = jax.random.split(rng_key, num_layers)

    vmem = pl.BlockSpec(memory_space=pltpu.MemorySpace.VMEM)

    d_in_pad = _round_up(d_in, LANE)
    x_pad = jnp.zeros((batch, d_in_pad), x.dtype).at[:, :d_in].set(x)

    inputs = [x_pad]
    in_specs = [vmem]
    prev_pad = d_in_pad
    for i, (w, b) in enumerate(params):
        di, do = w.shape
        assert b.shape == (1, do)
        do_pad = _round_up(do, LANE)
        w_pad = jnp.zeros((prev_pad, do_pad), jnp.float32).at[:di, :do].set(
            w.astype(jnp.float32) * keep_scale)
        b_pad = jnp.zeros((1, do_pad), jnp.float32).at[:, :do].set(
            b.astype(jnp.float32) * keep_scale)
        inputs += [w_pad, b_pad]
        in_specs += [vmem, vmem]
        if use_dropout:
            bits = jax.random.bits(layer_keys[i], (batch, do_pad), jnp.uint32)
            inputs.append(bits)
            in_specs.append(vmem)
        prev_pad = do_pad

    d_out = params[-1][0].shape[1]

    kernel = functools.partial(
        _mlp_fused_kernel,
        num_layers=num_layers,
        dropout_p=float(dropout_p),
        negative_slope=float(negative_slope),
        use_dropout=use_dropout,
    )

    out_pad = pl.pallas_call(
        kernel,
        out_shape=jax.ShapeDtypeStruct((batch, prev_pad), x.dtype),
        in_specs=in_specs,
        out_specs=vmem,
    )(*inputs)

    return out_pad[:, :d_out]


# ----------------------------------------------------------------------------
# Parameter init matching PyTorch nn.Linear default:
#   U(-1/sqrt(fan_in), 1/sqrt(fan_in)) for both W and b.
# Weights are stored pre-transposed as (in_features, out_features).
# ----------------------------------------------------------------------------
def init_mlp_params(layer_sizes, key):
    params = []
    for i in range(len(layer_sizes) - 1):
        d_in, d_out = layer_sizes[i], layer_sizes[i + 1]
        key, wk, bk = jax.random.split(key, 3)
        bound = 1.0 / (d_in ** 0.5)
        w = jax.random.uniform(wk, (d_in, d_out), jnp.float32, -bound, bound)
        b = jax.random.uniform(bk, (1, d_out), jnp.float32, -bound, bound)
        params.append((w, b))
    return params


# Pure-JAX reference (eval mode: dropout is identity) for correctness check.
def _mlp_reference_eval(params, x, negative_slope=0.01):
    h = x
    for w, b in params:
        y = h @ w + b
        h = jnp.where(y >= 0.0, y, negative_slope * y)
    return h


if __name__ == "__main__":
    layer_sizes = [32, 64, 16]     # MLP([32, 64, 16], dropout=0.3)
    batch = 8
    dropout_p = 0.3

    key = jax.random.PRNGKey(0)
    key, xk, dk = jax.random.split(key, 3)
    x = jax.random.normal(xk, (batch, layer_sizes[0]), jnp.float32)
    params = init_mlp_params(layer_sizes, key)

    # Training mode (dropout active). The mask stream comes from jax.random,
    # not torch's RNG, so masks won't match torch bit-for-bit.
    # TODO(synk): thread a step-dependent rng_key in a real training loop.
    out_train = jax.block_until_ready(
        mlp_forward(params, x, dropout_p=dropout_p, training=True, rng_key=dk))
    assert out_train.shape == (batch, layer_sizes[-1])
    assert out_train.dtype == jnp.float32

    # Eval mode (dropout = identity) — compare against a pure-JAX reference.
    out_eval = jax.block_until_ready(
        mlp_forward(params, x, dropout_p=dropout_p, training=False))
    ref_eval = _mlp_reference_eval(params, x)
    assert out_eval.shape == (batch, layer_sizes[-1])
    assert jnp.allclose(out_eval, ref_eval, atol=1e-5, rtol=1e-5), (
        "eval-mode mismatch vs reference")

    print("KERNEL_OK")
</pallas_src>

<mosaic_0001>
module attributes {stable_mosaic.version = 11 : i64} {
  func.func @_mlp_fused_kernel(%arg0: memref<8x128xf32, #tpu.memory_space<vmem>>, %arg1: memref<128x128xf32, #tpu.memory_space<vmem>>, %arg2: memref<1x128xf32, #tpu.memory_space<vmem>>, %arg3: memref<8x128xi32, #tpu.memory_space<vmem>>, %arg4: memref<128x128xf32, #tpu.memory_space<vmem>>, %arg5: memref<1x128xf32, #tpu.memory_space<vmem>>, %arg6: memref<8x128xi32, #tpu.memory_space<vmem>>, %arg7: memref<8x128xf32, #tpu.memory_space<vmem>>) attributes {dimension_semantics = [], scalar_prefetch = 0 : i64, scratch_operands = 0 : i64, tpu.core_type = #tpu.core_type<tc>} {
    %c0 = arith.constant 0 : index
    %c0_0 = arith.constant 0 : index
    %0 = vector.load %arg0[%c0, %c0_0] : memref<8x128xf32, #tpu.memory_space<vmem>>, vector<8x128xf32>
    %c0_1 = arith.constant 0 : index
    %c0_2 = arith.constant 0 : index
    %1 = vector.load %arg1[%c0_1, %c0_2] : memref<128x128xf32, #tpu.memory_space<vmem>>, vector<128x128xf32>
    %cst = arith.constant dense<0.000000e+00> : vector<8x128xf32>
    %2 = tpu.matmul %0, %1, %cst {dimension_numbers = #tpu.dot_dimension_numbers<[1], [0], [0], [1], [0, 0, 1, 1], [], []>} : vector<8x128xf32>, vector<128x128xf32>, vector<8x128xf32> -> vector<8x128xf32>
    %c0_3 = arith.constant 0 : index
    %c0_4 = arith.constant 0 : index
    %3 = vector.load %arg2[%c0_3, %c0_4] : memref<1x128xf32, #tpu.memory_space<vmem>>, vector<1x128xf32>
    %4 = vector.broadcast %3 : vector<1x128xf32> to vector<8x128xf32>
    %5 = arith.addf %2, %4 : vector<8x128xf32>
    %c0_5 = arith.constant 0 : index
    %c0_6 = arith.constant 0 : index
    %6 = vector.load %arg3[%c0_5, %c0_6] : memref<8x128xi32, #tpu.memory_space<vmem>>, vector<8x128xi32>
    %c1288490189_i32 = arith.constant 1288490189 : i32
    %7 = vector.broadcast %c1288490189_i32 : i32 to vector<8x128xi32>
    %8 = arith.cmpi uge, %6, %7 : vector<8x128xi32>
    %cst_7 = arith.constant 0.000000e+00 : f32
    %9 = vector.broadcast %cst_7 : f32 to vector<8x128xf32>
    %10 = arith.select %8, %5, %9 : vector<8x128xi1>, vector<8x128xf32>
    %cst_8 = arith.constant 0.000000e+00 : f32
    %11 = vector.broadcast %cst_8 : f32 to vector<8x128xf32>
    %12 = arith.cmpf oge, %10, %11 : vector<8x128xf32>
    %cst_9 = arith.constant 0.00999999977 : f32
    %13 = vector.broadcast %cst_9 : f32 to vector<8x128xf32>
    %14 = arith.mulf %13, %10 : vector<8x128xf32>
    %15 = arith.select %12, %10, %14 : vector<8x128xi1>, vector<8x128xf32>
    %c0_10 = arith.constant 0 : index
    %c0_11 = arith.constant 0 : index
    %16 = vector.load %arg4[%c0_10, %c0_11] : memref<128x128xf32, #tpu.memory_space<vmem>>, vector<128x128xf32>
    %cst_12 = arith.constant dense<0.000000e+00> : vector<8x128xf32>
    %17 = tpu.matmul %15, %16, %cst_12 {dimension_numbers = #tpu.dot_dimension_numbers<[1], [0], [0], [1], [0, 0, 1, 1], [], []>} : vector<8x128xf32>, vector<128x128xf32>, vector<8x128xf32> -> vector<8x128xf32>
    %c0_13 = arith.constant 0 : index
    %c0_14 = arith.constant 0 : index
    %18 = vector.load %arg5[%c0_13, %c0_14] : memref<1x128xf32, #tpu.memory_space<vmem>>, vector<1x128xf32>
    %19 = vector.broadcast %18 : vector<1x128xf32> to vector<8x128xf32>
    %20 = arith.addf %17, %19 : vector<8x128xf32>
    %c0_15 = arith.constant 0 : index
    %c0_16 = arith.constant 0 : index
    %21 = vector.load %arg6[%c0_15, %c0_16] : memref<8x128xi32, #tpu.memory_space<vmem>>, vector<8x128xi32>
    %c1288490189_i32_17 = arith.constant 1288490189 : i32
    %22 = vector.broadcast %c1288490189_i32_17 : i32 to vector<8x128xi32>
    %23 = arith.cmpi uge, %21, %22 : vector<8x128xi32>
    %cst_18 = arith.constant 0.000000e+00 : f32
    %24 = vector.broadcast %cst_18 : f32 to vector<8x128xf32>
    %25 = arith.select %23, %20, %24 : vector<8x128xi1>, vector<8x128xf32>
    %cst_19 = arith.constant 0.000000e+00 : f32
    %26 = vector.broadcast %cst_19 : f32 to vector<8x128xf32>
    %27 = arith.cmpf oge, %25, %26 : vector<8x128xf32>
    %cst_20 = arith.constant 0.00999999977 : f32
    %28 = vector.broadcast %cst_20 : f32 to vector<8x128xf32>
    %29 = arith.mulf %28, %25 : vector<8x128xf32>
    %30 = arith.select %27, %25, %29 : vector<8x128xi1>, vector<8x128xf32>
    %c0_21 = arith.constant 0 : index
    %c0_22 = arith.constant 0 : index
    %31 = vector.load %arg7[%c0_21, %c0_22] : memref<8x128xf32, #tpu.memory_space<vmem>>, vector<8x128xf32>
    tpu.vector_store %arg7[%c0_21, %c0_22], %30 {strides = array<i32>} : memref<8x128xf32, #tpu.memory_space<vmem>>, vector<8x128xf32>,
    return
  }
}

</mosaic_0001>

<llo_original>
// kernel: tpu_custom_call.1
$region0: #{tpu_custom_call.1}
  #allocation0 [shape = 'u32[]', space=smem, size = 0x4, offset = 0x4, fixed_abs, tag = 'smem constant byte address 0x4 - core index']
  #allocation1 [shape = 'u32[144,128]{1,0:T(1,128)}', space=vmem, size = 0x12000, scoped, tag = 'internal scratch']
  %s0 = inlined_call_operand.hbm [shape: f32[8,128], index: 0, kind: input, shape index: {}]
  %s1 = inlined_call_operand.hbm [shape: f32[128,128], index: 1, kind: input, shape index: {}]
  %s2 = inlined_call_operand.vmem [shape: f32[1,128], index: 2, kind: input, shape index: {}]
  %s3 = inlined_call_operand.vmem [shape: u32[8,128], index: 3, kind: input, shape index: {}]
  %s4 = inlined_call_operand.hbm [shape: f32[128,128], index: 4, kind: input, shape index: {}]
  %s5 = inlined_call_operand.vmem [shape: f32[1,128], index: 5, kind: input, shape index: {}]
  %s6 = inlined_call_operand.vmem [shape: u32[8,128], index: 6, kind: input, shape index: {}]
  %s7 = inlined_call_operand.hbm [shape: f32[8,128], index: 7, kind: output, shape index: {}]
  %s8 = sld [smem:[#allocation0]]
  $region50: #{tpu_custom_call.1} parent=0
    _
  %s10 = ssub.s32 1, %s8
  %s11 = scalar_select 0, %s10, %s8
  $region1: #{tpu_custom_call.1} parent=0
    #allocation2 [shape = 'u8[4096]{0}', space=vmem, size = 0x1000, scoped, tag = 'input window, operand 0, single buffered']
    #allocation3 [shape = 's32[1]{0}', space=sflag, size = 0x4, scoped, tag = 'scoped memory for tpu_custom_call.1']
    #allocation4 [shape = 's32[1]{0}', space=sflag, size = 0x4, scoped, tag = 'scoped memory for tpu_custom_call.1']
    #allocation5 [shape = 'u8[65536]{0}', space=vmem, size = 0x10000, scoped, tag = 'input window, operand 1, single buffered']
    #allocation6 [shape = 's32[1]{0}', space=sflag, size = 0x4, scoped, tag = 'scoped memory for tpu_custom_call.1']
    #allocation7 [shape = 'u8[65536]{0}', space=vmem, size = 0x10000, scoped, tag = 'input window, operand 4, single buffered']
    #allocation8 [shape = 'u8[4096]{0}', space=vmem, size = 0x1000, scoped, tag = 'output window, operand 0, single buffered']
    %12 = vsyncpa [#allocation3], 0
    %13 = vsyncpa [#allocation6], 0
    %14 = vsyncpa [#allocation4], 0
    // Predicated region
    $region2: #{tpu_custom_call.1} parent=1 // pred_check
      _
    $region3: #{tpu_custom_call.1} parent=1 // pred_check_branch
      %16 = sbr.rel (0) target = $region5
    $region4: #{tpu_custom_call.1} parent=1 // pred_region
      %s18 = ssub.s32 128, 128
      %19 = vsyncadd [#allocation3], %s18
      %s21 = sshll.u32 [#allocation2], 4
      %s22 = int_to_ptr.vmem [resolvable:$true] %s21
      %24 = dma.hbm_to_vmem [thread:$0]  %s0, 128, %s22, [#allocation3]
    $region5: #{tpu_custom_call.1} parent=1 // pred_fallthru
      _
    // Predicated region
    $region6: #{tpu_custom_call.1} parent=1 // pred_check
      _
    $region7: #{tpu_custom_call.1} parent=1 // pred_check_branch
      %26 = sbr.rel (0) target = $region9
    $region8: #{tpu_custom_call.1} parent=1 // pred_region
      %s28 = ssub.s32 2048, 2048
      %29 = vsyncadd [#allocation6], %s28
      %s30 = sshll.u32 [#allocation5], 4
      %s31 = int_to_ptr.vmem [resolvable:$true] %s30
      %36 = dma.hbm_to_vmem [thread:$0]  %s1, 2048, %s31, [#allocation6], 128, 128, 8
    $region9: #{tpu_custom_call.1} parent=1 // pred_fallthru
      _
    // Predicated region
    $region10: #{tpu_custom_call.1} parent=1 // pred_check
      _
    $region11: #{tpu_custom_call.1} parent=1 // pred_check_branch
      %38 = sbr.rel (0) target = $region13
    $region12: #{tpu_custom_call.1} parent=1 // pred_region
      _
    $region13: #{tpu_custom_call.1} parent=1 // pred_fallthru
      _
    // Predicated region
    $region14: #{tpu_custom_call.1} parent=1 // pred_check
      _
    $region15: #{tpu_custom_call.1} parent=1 // pred_check_branch
      %40 = sbr.rel (0) target = $region17
    $region16: #{tpu_custom_call.1} parent=1 // pred_region
      _
    $region17: #{tpu_custom_call.1} parent=1 // pred_fallthru
      _
    // Predicated region
    $region18: #{tpu_custom_call.1} parent=1 // pred_check
      _
    $region19: #{tpu_custom_call.1} parent=1 // pred_check_branch
      %42 = sbr.rel (0) target = $region21
    $region20: #{tpu_custom_call.1} parent=1 // pred_region
      %s44 = ssub.s32 2048, 2048
      %45 = vsyncadd [#allocation6], %s44
      %s46 = sshll.u32 [#allocation7], 4
      %s47 = int_to_ptr.vmem [resolvable:$true] %s46
      %52 = dma.hbm_to_vmem [thread:$0]  %s4, 2048, %s47, [#allocation6], 128, 128, 8
    $region21: #{tpu_custom_call.1} parent=1 // pred_fallthru
      _
    // Predicated region
    $region22: #{tpu_custom_call.1} parent=1 // pred_check
      _
    $region23: #{tpu_custom_call.1} parent=1 // pred_check_branch
      %54 = sbr.rel (0) target = $region25
    $region24: #{tpu_custom_call.1} parent=1 // pred_region
      _
    $region25: #{tpu_custom_call.1} parent=1 // pred_fallthru
      _
    // Predicated region
    $region26: #{tpu_custom_call.1} parent=1 // pred_check
      _
    $region27: #{tpu_custom_call.1} parent=1 // pred_check_branch
      %56 = sbr.rel (0) target = $region29
    $region28: #{tpu_custom_call.1} parent=1 // pred_region
      _
    $region29: #{tpu_custom_call.1} parent=1 // pred_fallthru
      _
    // Predicated region
    $region30: #{tpu_custom_call.1} parent=1 // pred_check
      _
    $region31: #{tpu_custom_call.1} parent=1 // pred_check_branch
      %58 = sbr.rel (0) target = $region33
    $region32: #{tpu_custom_call.1} parent=1 // pred_region
      %59 = dma.done [#allocation3], 128
    $region33: #{tpu_custom_call.1} parent=1 // pred_fallthru
      _
    // Predicated region
    $region34: #{tpu_custom_call.1} parent=1 // pred_check
      _
    $region35: #{tpu_custom_call.1} parent=1 // pred_check_branch
      %61 = sbr.rel (0) target = $region37
    $region36: #{tpu_custom_call.1} parent=1 // pred_region
      %62 = dma.done [#allocation6], 2048
    $region37: #{tpu_custom_call.1} parent=1 // pred_fallthru
      _
    // Predicated region
    $region38: #{tpu_custom_call.1} parent=1 // pred_check
      _
    $region39: #{tpu_custom_call.1} parent=1 // pred_check_branch
      %64 = sbr.rel (0) target = $region41
    $region40: #{tpu_custom_call.1} parent=1 // pred_region
      %65 = dma.done [#allocation6], 2048
    $region41: #{tpu_custom_call.1} parent=1 // pred_fallthru
      _
    %v66 = vld [vmem:[#allocation2] sm:$0xff]
    %v67 = vld [vmem:[#allocation5] sm:$0xff]
    %v68 = vld [vmem:[#allocation5 + $0x8] sm:$0xff]
    %v69 = vld [vmem:[#allocation5 + $0x10] sm:$0xff]
    %v70 = vld [vmem:[#allocation5 + $0x18] sm:$0xff]
    %v71 = vld [vmem:[#allocation5 + $0x20] sm:$0xff]
    %v72 = vld [vmem:[#allocation5 + $0x28] sm:$0xff]
    %v73 = vld [vmem:[#allocation5 + $0x30] sm:$0xff]
    %v74 = vld [vmem:[#allocation5 + $0x38] sm:$0xff]
    %v75 = vld [vmem:[#allocation5 + $0x40] sm:$0xff]
    %v76 = vld [vmem:[#allocation5 + $0x48] sm:$0xff]
    %v77 = vld [vmem:[#allocation5 + $0x50] sm:$0xff]
    %v78 = vld [vmem:[#allocation5 + $0x58] sm:$0xff]
    %v79 = vld [vmem:[#allocation5 + $0x60] sm:$0xff]
    %v80 = vld [vmem:[#allocation5 + $0x68] sm:$0xff]
    %v81 = vld [vmem:[#allocation5 + $0x70] sm:$0xff]
    %v82 = vld [vmem:[#allocation5 + $0x78] sm:$0xff]
    %v83 = vld [vmem:[%s2] sm:$0x1]
    %v85 = vlaneseq
    %v86 = vshrl.u32 %v85, 7
    %v87 = vsub.s32 0, %v86
    %v88 = vrot.slane %v83, %v87
    %90 = vmatprep.subr.mxu0 0.0
    %91 = vmatpush1.msra.mxu0 %v67
    %92 = vmatprep.subr.mxu0 0.0
    %93 = vmatpush1.msra.mxu0 %v68
    %94 = vmatprep.subr.mxu0 0.0
    %95 = vmatpush1.msra.mxu0 %v69
    %96 = vmatprep.subr.mxu0 0.0
    %97 = vmatpush1.msra.mxu0 %v70
    %98 = vmatprep.subr.mxu0 0.0
    %99 = vmatpush1.msra.mxu0 %v71
    %100 = vmatprep.subr.mxu0 0.0
    %101 = vmatpush1.msra.mxu0 %v72
    %102 = vmatprep.subr.mxu0 0.0
    %103 = vmatpush1.msra.mxu0 %v73
    %104 = vmatprep.subr.mxu0 0.0
    %105 = vmatpush1.msra.mxu0 %v74
    %106 = vmatprep.subr.mxu0 0.0
    %107 = vmatpush1.msra.mxu0 %v75
    %108 = vmatprep.subr.mxu0 0.0
    %109 = vmatpush1.msra.mxu0 %v76
    %110 = vmatprep.subr.mxu0 0.0
    %111 = vmatpush1.msra.mxu0 %v77
    %112 = vmatprep.subr.mxu0 0.0
    %113 = vmatpush1.msra.mxu0 %v78
    %114 = vmatprep.subr.mxu0 0.0
    %115 = vmatpush1.msra.mxu0 %v79
    %116 = vmatprep.subr.mxu0 0.0
    %117 = vmatpush1.msra.mxu0 %v80
    %118 = vmatprep.subr.mxu0 0.0
    %119 = vmatpush1.msra.mxu0 %v81
    %120 = vmatprep.subr.mxu0 0.0
    %121 = vmatpush1.msra.mxu0 %v82
    %122 = vmatprep.subr.mxu0 0.0
    %123 = vmatpush1.msra.mxu0 0.0
    %124 = vmatprep.subr.mxu0 0.0
    %125 = vmatpush1.msra.mxu0 0.0
    %126 = vmatprep.subr.mxu0 0.0
    %127 = vmatpush1.msra.mxu0 0.0
    %128 = vmatprep.subr.mxu0 0.0
    %129 = vmatpush1.msra.mxu0 0.0
    %130 = vmatprep.subr.mxu0 0.0
    %131 = vmatpush1.msra.mxu0 0.0
    %132 = vmatprep.subr.mxu0 0.0
    %133 = vmatpush1.msra.mxu0 0.0
    %134 = vmatprep.subr.mxu0 0.0
    %135 = vmatpush1.msra.mxu0 0.0
    %136 = vmatprep.subr.mxu0 0.0
    %137 = vmatpush1.msra.mxu0 0.0
    %138 = vmatprep.subr.mxu0 0.0
    %139 = vmatpush1.msra.mxu0 0.0
    %140 = vmatprep.subr.mxu0 0.0
    %141 = vmatpush1.msra.mxu0 0.0
    %142 = vmatprep.subr.mxu0 0.0
    %143 = vmatpush1.msra.mxu0 0.0
    %144 = vmatprep.subr.mxu0 0.0
    %145 = vmatpush1.msra.mxu0 0.0
    %146 = vmatprep.subr.mxu0 0.0
    %147 = vmatpush1.msra.mxu0 0.0
    %148 = vmatprep.subr.mxu0 0.0
    %149 = vmatpush1.msra.mxu0 0.0
    %150 = vmatprep.subr.mxu0 0.0
    %151 = vmatpush1.msra.mxu0 0.0
    %152 = vmatprep.subr.mxu0 0.0
    %153 = vmatpush1.msra.mxu0 0.0
    %154 = vmatprep.mubr.f32.mxu0 0.0
    %155 = vmatmul.mubr.f32.gmra.mrb[0].mxu0 %v66
    %v156 = vpop.f32.mrb[0].mxu0
    %v157 = vadd.f32 %v88, %v156
    %v158 = vpop.f32.mrb[0].mxu0
    %159 = vdwg.mxu0
    %v160 = vld [vmem:[%s3] sm:$0xff]
    %vm161 = vcmp.ge.u32.totalorder %v160, 1288490189
    %v162 = vsel %vm161, %v157, 0.0
    %vm163 = vcmp.ge.f32.partialorder %v162, 0.0
    %v164 = vmul.f32 %v162, 0.01
    %v165 = vsel %vm163, %v162, %v164
    %v166 = vld [vmem:[#allocation7] sm:$0xff]
    %v167 = vld [vmem:[#allocation7 + $0x8] sm:$0xff]
    %v168 = vld [vmem:[#allocation7 + $0x10] sm:$0xff]
    %v169 = vld [vmem:[#allocation7 + $0x18] sm:$0xff]
    %v170 = vld [vmem:[#allocation7 + $0x20] sm:$0xff]
    %v171 = vld [vmem:[#allocation7 + $0x28] sm:$0xff]
    %v172 = vld [vmem:[#allocation7 + $0x30] sm:$0xff]
    %v173 = vld [vmem:[#allocation7 + $0x38] sm:$0xff]
    %v174 = vld [vmem:[#allocation7 + $0x40] sm:$0xff]
    %v175 = vld [vmem:[#allocation7 + $0x48] sm:$0xff]
    %v176 = vld [vmem:[#allocation7 + $0x50] sm:$0xff]
    %v177 = vld [vmem:[#allocation7 + $0x58] sm:$0xff]
    %v178 = vld [vmem:[#allocation7 + $0x60] sm:$0xff]
    %v179 = vld [vmem:[#allocation7 + $0x68] sm:$0xff]
    %v180 = vld [vmem:[#allocation7 + $0x70] sm:$0xff]
    %v181 = vld [vmem:[#allocation7 + $0x78] sm:$0xff]
    %v182 = vld [vmem:[%s5] sm:$0x1]
    %v184 = vlaneseq
    %v185 = vshrl.u32 %v184, 7
    %v186 = vsub.s32 0, %v185
    %v187 = vrot.slane %v182, %v186
    %189 = vmatprep.subr.mxu0 0.0
    %190 = vmatpush1.msra.mxu0 %v166
    %191 = vmatprep.subr.mxu0 0.0
    %192 = vmatpush1.msra.mxu0 %v167
    %193 = vmatprep.subr.mxu0 0.0
    %194 = vmatpush1.msra.mxu0 %v168
    %195 = vmatprep.subr.mxu0 0.0
    %196 = vmatpush1.msra.mxu0 %v169
    %197 = vmatprep.subr.mxu0 0.0
    %198 = vmatpush1.msra.mxu0 %v170
    %199 = vmatprep.subr.mxu0 0.0
    %200 = vmatpush1.msra.mxu0 %v171
    %201 = vmatprep.subr.mxu0 0.0
    %202 = vmatpush1.msra.mxu0 %v172
    %203 = vmatprep.subr.mxu0 0.0
    %204 = vmatpush1.msra.mxu0 %v173
    %205 = vmatprep.subr.mxu0 0.0
    %206 = vmatpush1.msra.mxu0 %v174
    %207 = vmatprep.subr.mxu0 0.0
    %208 = vmatpush1.msra.mxu0 %v175
    %209 = vmatprep.subr.mxu0 0.0
    %210 = vmatpush1.msra.mxu0 %v176
    %211 = vmatprep.subr.mxu0 0.0
    %212 = vmatpush1.msra.mxu0 %v177
    %213 = vmatprep.subr.mxu0 0.0
    %214 = vmatpush1.msra.mxu0 %v178
    %215 = vmatprep.subr.mxu0 0.0
    %216 = vmatpush1.msra.mxu0 %v179
    %217 = vmatprep.subr.mxu0 0.0
    %218 = vmatpush1.msra.mxu0 %v180
    %219 = vmatprep.subr.mxu0 0.0
    %220 = vmatpush1.msra.mxu0 %v181
    %221 = vmatprep.subr.mxu0 0.0
    %222 = vmatpush1.msra.mxu0 0.0
    %223 = vmatprep.subr.mxu0 0.0
    %224 = vmatpush1.msra.mxu0 0.0
    %225 = vmatprep.subr.mxu0 0.0
    %226 = vmatpush1.msra.mxu0 0.0
    %227 = vmatprep.subr.mxu0 0.0
    %228 = vmatpush1.msra.mxu0 0.0
    %229 = vmatprep.subr.mxu0 0.0
    %230 = vmatpush1.msra.mxu0 0.0
    %231 = vmatprep.subr.mxu0 0.0
    %232 = vmatpush1.msra.mxu0 0.0
    %233 = vmatprep.subr.mxu0 0.0
    %234 = vmatpush1.msra.mxu0 0.0
    %235 = vmatprep.subr.mxu0 0.0
    %236 = vmatpush1.msra.mxu0 0.0
    %237 = vmatprep.subr.mxu0 0.0
    %238 = vmatpush1.msra.mxu0 0.0
    %239 = vmatprep.subr.mxu0 0.0
    %240 = vmatpush1.msra.mxu0 0.0
    %241 = vmatprep.subr.mxu0 0.0
    %242 = vmatpush1.msra.mxu0 0.0
    %243 = vmatprep.subr.mxu0 0.0
    %244 = vmatpush1.msra.mxu0 0.0
    %245 = vmatprep.subr.mxu0 0.0
    %246 = vmatpush1.msra.mxu0 0.0
    %247 = vmatprep.subr.mxu0 0.0
    %248 = vmatpush1.msra.mxu0 0.0
    %249 = vmatprep.subr.mxu0 0.0
    %250 = vmatpush1.msra.mxu0 0.0
    %251 = vmatprep.subr.mxu0 0.0
    %252 = vmatpush1.msra.mxu0 0.0
    %253 = vmatprep.mubr.f32.mxu0 0.0
    %254 = vmatmul.mubr.f32.gmra.mrb[0].mxu0 %v165
    %v255 = vpop.f32.mrb[0].mxu0
    %v256 = vadd.f32 %v187, %v255
    %v257 = vpop.f32.mrb[0].mxu0
    %258 = vdwg.mxu0
    %v259 = vld [vmem:[%s6] sm:$0xff]
    %vm260 = vcmp.ge.u32.totalorder %v259, 1288490189
    %v261 = vsel %vm260, %v256, 0.0
    %vm262 = vcmp.ge.f32.partialorder %v261, 0.0
    %v263 = vmul.f32 %v261, 0.01
    %v264 = vsel %vm262, %v261, %v263
    %265 = vst [vmem:[#allocation8] sm:$0xff] %v264
    // Predicated region
    $region42: #{tpu_custom_call.1} parent=1 // pred_check
      _
    $region43: #{tpu_custom_call.1} parent=1 // pred_check_branch
      %267 = sbr.rel (0) target = $region45
    $region44: #{tpu_custom_call.1} parent=1 // pred_region
      %s269 = ssub.s32 128, 128
      %270 = vsyncadd [#allocation4], %s269
      %s272 = sshll.u32 [#allocation8], 4
      %s273 = int_to_ptr.vmem [resolvable:$true] %s272
      %275 = dma.vmem_to_hbm [thread:$0]  %s273, 128, %s7, [#allocation4]
    $region45: #{tpu_custom_call.1} parent=1 // pred_fallthru
      _
    // Predicated region
    $region46: #{tpu_custom_call.1} parent=1 // pred_check
      _
    $region47: #{tpu_custom_call.1} parent=1 // pred_check_branch
      %277 = sbr.rel (0) target = $region49
    $region48: #{tpu_custom_call.1} parent=1 // pred_region
      %278 = dma.done [#allocation4], 128
    $region49: #{tpu_custom_call.1} parent=1 // pred_fallthru
      _
    %279 = vsyncpa [#allocation3], 1
    %280 = vsyncpa [#allocation6], 1
    %281 = vsyncpa [#allocation4], 1

</llo_original>
